<compile_context>
chip_gen: v6e
topology: v6e:2x2x1
jax: 0.10.0
libtpu: 0.0.40
codegen_flags: <defaults>
</compile_context>

<pallas_src>
import numpy as np
import jax
import jax.numpy as jnp
from jax.experimental import pallas as pl
from jax.experimental.pallas import tpu as pltpu


def _make_attention_kernel(has_mask: bool, has_bias: bool):
    """Kernel for one (TB, T, D) batch tile.

    Ref layouts:
      x_ref : (TB, T, D)  input dtype   input block
      w_ref : (1, 1, D)   f32           attention weight (VMEM-resident)
      m_ref : (TB, T, 1)  input dtype   optional mask block
      b_ref : (1, T, 1)   f32           optional bias (VMEM-resident)
      o_ref : (TB, D)     input dtype   output block (lane-dense)
    """

    def kernel(*refs):
        x_ref, w_ref = refs[0], refs[1]
        idx = 2
        m_ref = None
        b_ref = None
        if has_mask:
            m_ref = refs[idx]
            idx += 1
        if has_bias:
            b_ref = refs[idx]
            idx += 1
        o_ref = refs[idx]

        x = x_ref[...].astype(jnp.float32)                       # (TB, T, D)
        w = w_ref[...]                                           # (1, 1, D)

        # scores: e[b, t] = sum_d x[b, t, d] * w[d]  (lane reduce -> (TB, T, 1))
        e = jnp.sum(x * w, axis=-1, keepdims=True)
        if has_bias:
            e = e + b_ref[...]                                   # (1, T, 1) broadcast

        a = jnp.exp(jnp.tanh(e))                                 # EUP ops, (TB, T, 1)
        if has_mask:
            a = a * m_ref[...].astype(jnp.float32)

        # Deferred normalization: weighted sum with unnormalized a, then scale
        # the (TB, D) accumulator by the reciprocal of the normalizer.
        denom = jnp.sum(a, axis=1) + jnp.float32(1e-10)          # (TB, 1)
        acc = jnp.sum(x * a, axis=1)                             # (TB, D) sublane reduce
        inv = pl.reciprocal(denom, approx=True)                  # EUP slot
        o_ref[...] = (acc * inv).astype(o_ref.dtype)

    return kernel


def _vmem_budget_bytes():
    """Per-generation scoped-VMEM budget (leave headroom under physical)."""
    try:
        cap = int(pltpu.get_tpu_info().vmem_capacity_bytes)
    except Exception:
        cap = 64 * 1024 * 1024          # assume the smallest (v7x per-TC) if unknown
    return min((cap * 3) // 4, 96 * 1024 * 1024)


def _choose_batch_tiling(B, T, D, x_itemsize, vmem_budget):
    """Pick (TB, padded_B): biggest batch tile that fits VMEM, even grid >= 2."""
    # Sublane alignment of the (TB, ...) dims for the given element width.
    align = 8 if x_itemsize >= 4 else (16 if x_itemsize == 2 else 32)
    # VMEM per batch row: double-buffered x block + f32 temporaries
    # (f32 cast of x / x*w product / x*a product) + slack.
    bytes_per_row = T * D * (2 * x_itemsize + 12)
    tb_max = (vmem_budget // max(bytes_per_row, 1)) // align * align
    tb_max = max(align, min(tb_max, 512))

    b_pad = -(-B // align) * align
    if b_pad <= align:
        return align, align             # tiny batch: a single grid step
    # >= 2 grid steps (megacore), even count so both cores stay balanced.
    g = max(2, -(-b_pad // tb_max))
    if g % 2:
        g += 1
    rows_per_step = -(-b_pad // g)
    tb = -(-rows_per_step // align) * align
    return tb, g * tb


def attention_forward(x, weight, mask=None, bias=None):
    """Pallas forward pass of the Attention module.

    x:      (B, T, D) float32/bfloat16   (T = step_dim, D = feature_dim)
    weight: (D, 1) or (D,)
    mask:   optional (B, T)
    bias:   optional (T,)
    returns (B, D) in x.dtype
    """
    x = jnp.asarray(x)
    B, T, D = x.shape
    out_dtype = x.dtype
    w3 = jnp.asarray(weight, jnp.float32).reshape(1, 1, D)

    vmem_budget = _vmem_budget_bytes()
    TB, B_pad = _choose_batch_tiling(B, T, D, x.dtype.itemsize, vmem_budget)

    if B_pad != B:
        x = jnp.pad(x, ((0, B_pad - B), (0, 0), (0, 0)))
    grid = (B_pad // TB,)

    in_specs = [
        pl.BlockSpec((TB, T, D), lambda i: (i, 0, 0)),   # x tile
        pl.BlockSpec((1, 1, D), lambda i: (0, 0, 0)),    # weight (resident)
    ]
    args = [x, w3]

    has_mask = mask is not None
    has_bias = bias is not None
    bytes_accessed = (B_pad * T * D * x.dtype.itemsize
                      + B_pad * D * jnp.dtype(out_dtype).itemsize
                      + D * 4)
    if has_mask:
        m = jnp.asarray(mask).reshape(B, T, 1)
        if B_pad != B:
            m = jnp.pad(m, ((0, B_pad - B), (0, 0), (0, 0)))
        in_specs.append(pl.BlockSpec((TB, T, 1), lambda i: (i, 0, 0)))
        args.append(m)
        bytes_accessed += B_pad * T * m.dtype.itemsize
    if has_bias:
        in_specs.append(pl.BlockSpec((1, T, 1), lambda i: (0, 0, 0)))
        args.append(jnp.asarray(bias, jnp.float32).reshape(1, T, 1))
        bytes_accessed += T * 4

    kernel = _make_attention_kernel(has_mask, has_bias)

    out = pl.pallas_call(
        kernel,
        out_shape=jax.ShapeDtypeStruct((B_pad, D), out_dtype),
        grid_spec=pltpu.PrefetchScalarGridSpec(
            num_scalar_prefetch=0,
            grid=grid,
            in_specs=in_specs,
            out_specs=pl.BlockSpec((TB, D), lambda i: (i, 0)),
        ),
        compiler_params=pltpu.CompilerParams(
            # Batch tiles are independent -> shard across TensorCores on v7x.
            dimension_semantics=("parallel",),
            vmem_limit_bytes=vmem_budget,
        ),
        cost_estimate=pl.CostEstimate(
            flops=4 * B_pad * T * D,
            transcendentals=2 * B_pad * T,
            bytes_accessed=int(bytes_accessed),
        ),
    )(*args)

    return out[:B] if B_pad != B else out


def reference(x, weight, mask=None, bias=None):
    """Pure-JAX mirror of the PyTorch forward (correctness check)."""
    B, T, D = x.shape
    w = jnp.asarray(weight, jnp.float32).reshape(D)
    e = jnp.sum(x.astype(jnp.float32) * w[None, None, :], axis=-1)   # (B, T)
    if bias is not None:
        e = e + bias[None, :]
    a = jnp.exp(jnp.tanh(e))
    if mask is not None:
        a = a * mask.astype(jnp.float32)
    a = a / (jnp.sum(a, axis=1, keepdims=True) + 1e-10)
    return jnp.sum(x.astype(jnp.float32) * a[:, :, None], axis=1)    # (B, D)


if __name__ == "__main__":
    key = jax.random.PRNGKey(0)
    k_x, k_w, k_m, k_b, k_x2 = jax.random.split(key, 5)

    # Small shapes consistent with the module: batch=16, step_dim=16, feature_dim=256.
    B, T, D = 16, 16, 256
    x = jax.random.normal(k_x, (B, T, D), dtype=jnp.float32)

    # kaiming_uniform_ on a (feature_dim, 1) tensor: fan_in = 1 -> bound = sqrt(6).
    bound = float(np.sqrt(6.0))
    weight = jax.random.uniform(k_w, (D, 1), jnp.float32, minval=-bound, maxval=bound)

    mask = (jax.random.uniform(k_m, (B, T)) > 0.3).astype(jnp.float32)
    bias = 0.1 * jax.random.normal(k_b, (T,), dtype=jnp.float32)

    # Default usage (bias=False, mask=None), masked path, and mask + bias path.
    out_plain = jax.block_until_ready(attention_forward(x, weight))
    out_mask = jax.block_until_ready(attention_forward(x, weight, mask=mask))
    out_mb = jax.block_until_ready(attention_forward(x, weight, mask=mask, bias=bias))
    assert out_plain.shape == (B, D)

    # Non-multiple-of-8 batch exercises the padded-batch path.
    B2 = 13
    x2 = jax.random.normal(k_x2, (B2, T, D), dtype=jnp.float32)
    out_pad = jax.block_until_ready(attention_forward(x2, weight))
    assert out_pad.shape == (B2, D)

    ref_plain = jax.block_until_ready(reference(x, weight))
    ref_mask = jax.block_until_ready(reference(x, weight, mask=mask))
    ref_mb = jax.block_until_ready(reference(x, weight, mask=mask, bias=bias))
    ref_pad = jax.block_until_ready(reference(x2, weight))

    np.testing.assert_allclose(np.asarray(out_plain), np.asarray(ref_plain),
                               rtol=2e-3, atol=2e-3)
    np.testing.assert_allclose(np.asarray(out_mask), np.asarray(ref_mask),
                               rtol=2e-3, atol=2e-3)
    np.testing.assert_allclose(np.asarray(out_mb), np.asarray(ref_mb),
                               rtol=2e-3, atol=2e-3)
    np.testing.assert_allclose(np.asarray(out_pad), np.asarray(ref_pad),
                               rtol=2e-3, atol=2e-3)

    print("KERNEL_OK")
</pallas_src>

<mosaic_0001>
module attributes {stable_mosaic.version = 11 : i64} {
  func.func @kernel(%arg0: i32, %arg1: memref<8x16x256xf32, #tpu.memory_space<vmem>>, %arg2: memref<1x1x256xf32, #tpu.memory_space<vmem>>, %arg3: memref<8x256xf32, #tpu.memory_space<vmem>>) attributes {dimension_semantics = [#tpu.dimension_semantics<parallel>], iteration_bounds = array<i64: 2>, scalar_prefetch = 0 : i64, scratch_operands = 0 : i64, tpu.core_type = #tpu.core_type<tc>, window_params = [{transform_indices = @transform_0, window_bounds = array<i64: 8, 16, 256>}, {pipeline_mode = #tpu.pipeline_mode<synchronous>, transform_indices = @transform_1, window_bounds = array<i64: 1, 1, 256>}, {transform_indices = @transform_2, window_bounds = array<i64: 8, 256>}]} {
    %c0 = arith.constant 0 : index
    %c0_0 = arith.constant 0 : index
    %c0_1 = arith.constant 0 : index
    %0 = vector.load %arg1[%c0, %c0_0, %c0_1] : memref<8x16x256xf32, #tpu.memory_space<vmem>>, vector<8x16x256xf32>
    %c0_2 = arith.constant 0 : index
    %c0_3 = arith.constant 0 : index
    %c0_4 = arith.constant 0 : index
    %1 = vector.load %arg2[%c0_2, %c0_3, %c0_4] : memref<1x1x256xf32, #tpu.memory_space<vmem>>, vector<1x1x256xf32>
    %2 = vector.broadcast %1 : vector<1x1x256xf32> to vector<8x16x256xf32>
    %3 = arith.mulf %0, %2 : vector<8x16x256xf32>
    %cst = arith.constant dense<0.000000e+00> : vector<8x16xf32>
    %4 = vector.multi_reduction <add>, %3, %cst [2] : vector<8x16x256xf32> to vector<8x16xf32>
    %5 = vector.shape_cast %4 : vector<8x16xf32> to vector<8x16x1xf32>
    %6 = math.tanh %5 : vector<8x16x1xf32>
    %7 = math.exp %6 : vector<8x16x1xf32>
    %cst_5 = arith.constant dense<0.000000e+00> : vector<8x1xf32>
    %8 = vector.multi_reduction <add>, %7, %cst_5 [1] : vector<8x16x1xf32> to vector<8x1xf32>
    %cst_6 = arith.constant 1.000000e-10 : f32
    %9 = vector.broadcast %cst_6 : f32 to vector<8x1xf32>
    %10 = arith.addf %8, %9 : vector<8x1xf32>
    %11 = vector.broadcast %7 : vector<8x16x1xf32> to vector<8x16x256xf32>
    %12 = arith.mulf %0, %11 : vector<8x16x256xf32>
    %cst_7 = arith.constant dense<0.000000e+00> : vector<8x256xf32>
    %13 = vector.multi_reduction <add>, %12, %cst_7 [1] : vector<8x16x256xf32> to vector<8x256xf32>
    %14 = tpu.reciprocal %10 {approx = true} : vector<8x1xf32> -> vector<8x1xf32>
    %15 = vector.broadcast %14 : vector<8x1xf32> to vector<8x256xf32>
    %16 = arith.mulf %13, %15 : vector<8x256xf32>
    %c0_8 = arith.constant 0 : index
    %c0_9 = arith.constant 0 : index
    %17 = vector.load %arg3[%c0_8, %c0_9] : memref<8x256xf32, #tpu.memory_space<vmem>>, vector<8x256xf32>
    tpu.vector_store %arg3[%c0_8, %c0_9], %16 {strides = array<i32>} : memref<8x256xf32, #tpu.memory_space<vmem>>, vector<8x256xf32>,
    return
  }
  func.func @transform_0(%arg0: i32) -> (i32, i32, i32) {
    %c0_i32 = arith.constant 0 : i32
    %c0_i32_0 = arith.constant 0 : i32
    %c0_i32_1 = arith.constant 0 : i32
    return %arg0, %c0_i32, %c0_i32_0 : i32, i32, i32
  }
  func.func @transform_1(%arg0: i32) -> (i32, i32, i32) {
    %c0_i32 = arith.constant 0 : i32
    %c0_i32_0 = arith.constant 0 : i32
    %c0_i32_1 = arith.constant 0 : i32
    %c0_i32_2 = arith.constant 0 : i32
    return %c0_i32, %c0_i32_0, %c0_i32_1 : i32, i32, i32
  }
  func.func @transform_2(%arg0: i32) -> (i32, i32) {
    %c0_i32 = arith.constant 0 : i32
    %c0_i32_0 = arith.constant 0 : i32
    return %arg0, %c0_i32 : i32, i32
  }
}

</mosaic_0001>

<llo_original>
// kernel: tpu_custom_call.1
$region0: #{tpu_custom_call.1}
  #allocation0 [shape = 'u32[]', space=smem, size = 0x4, offset = 0x4, fixed_abs, tag = 'smem constant byte address 0x4 - core index']
  #allocation1 [shape = 'u32[144,128]{1,0:T(1,128)}', space=vmem, size = 0x12000, scoped, tag = 'internal scratch']
  %s0 = inlined_call_operand.hbm [shape: f32[16,16,256], index: 0, kind: input, shape index: {}]
  %s1 = inlined_call_operand.hbm [shape: f32[1,1,256], index: 1, kind: input, shape index: {}]
  %s2 = inlined_call_operand.hbm [shape: f32[16,256], index: 2, kind: output, shape index: {}]
  %s3 = sld [smem:[#allocation0]]
  $region49: #{tpu_custom_call.1} parent=0
    _
  %s5 = ssub.s32 1, %s3
  %s6 = scalar_select 0, %s5, %s3
  $region1: #{tpu_custom_call.1} parent=0
    #allocation2 [shape = 'u8[262144]{0}', space=vmem, size = 0x40000, scoped, tag = 'input window, operand 0']
    #allocation3 [shape = 's32[2]{0}', space=sflag, size = 0x8, scoped, tag = 'scoped memory for tpu_custom_call.1']
    #allocation4 [shape = 's32[2]{0}', space=sflag, size = 0x8, scoped, tag = 'scoped memory for tpu_custom_call.1']
    #allocation5 [shape = 'u8[1024]{0}', space=vmem, size = 0x400, scoped, tag = 'input window, operand 1, single buffered']
    #allocation6 [shape = 's32[1]{0}', space=sflag, size = 0x4, scoped, tag = 'scoped memory for tpu_custom_call.1']
    #allocation7 [shape = 'u8[16384]{0}', space=vmem, size = 0x4000, scoped, tag = 'output window, operand 0']
    %7 = vsyncpa [#allocation3], 0
    %s8 = scalar_lea.sflag [#allocation3], 1
    %9 = vsyncpa %s8, 0
    %10 = vsyncpa [#allocation6], 0
    %11 = vsyncpa [#allocation4], 0
    %s12 = scalar_lea.sflag [#allocation4], 1
    %13 = vsyncpa %s12, 0
    loop: start=0, step=1, limit=4
    $region2: #{tpu_custom_call.1} parent=1 // loop_pre_header
      _
    $region3: #{tpu_custom_call.1} parent=1 // loop_header
      %s15 = sphi 0, %s19
      %p16 = scmp.ge.s32.totalorder %s15, 4
      %s25 = sphi 0, %s27
      %s28 = sphi 0, %s25
      %s29 = sphi 0, %s28
      %s45 = sphi 0, %s29
      %s49 = sphi 0, %s49
      %s51 = sphi 0, %s49
      %s52 = sphi 0, %s51
      %s66 = sphi 0, %s52
      %s72 = sphi 0, %s74
      %s75 = sphi 0, %s72
      %s76 = sphi 0, %s75
      %s92 = sphi 0, %s76
    $region4: #{tpu_custom_call.1} parent=1 // loop_header_branch
      %18 = sbr.rel (%p16) target = $region8
    $region5: #{tpu_custom_call.1} parent=1 // loop_body
      %s20 = ssub.s32 %s15, 1
      %s21 = ssub.s32 %s15, 2
      %s22 = sadd.s32 %s15, 1
      %s23 = ssub.s32 %s15, %s22
      %p24 = scmp.eq.s32.totalorder %s23, 0
      %s26 = sadd.s32 %s25, 1
      %s27 = scalar_select %p24, %s25, %s26
      %p30 = pneg %p24
      %p31 = scmp.eq.s32.totalorder %s15, 1
      %p32 = por %p30, %p31
      %p33 = scmp.ne.s32.totalorder %s25, %s28
      %p34 = scmp.eq.s32.totalorder %s15, 0
      %p35 = por %p33, %p34
      %p36 = scmp.ne.s32.totalorder %s25, %s28
      %p37 = scmp.eq.s32.totalorder %s20, 1
      %p38 = por %p36, %p37
      %p39 = scmp.ne.s32.totalorder %s28, %s29
      %p40 = scmp.eq.s32.totalorder %s20, 0
      %p41 = por %p39, %p40
      %p42 = scmp.ne.s32.totalorder %s28, %s29
      %p43 = scmp.eq.s32.totalorder %s21, 1
      %p44 = por %p42, %p43
      %p46 = scmp.ne.s32.totalorder %s29, %s45
      %p47 = scmp.eq.s32.totalorder %s21, 0
      %p48 = por %p46, %p47
      %s50 = sadd.s32 %s49, 1
      %p53 = scmp.eq.s32.totalorder %s15, 1
      %p54 = scmp.ne.s32.totalorder %s49, %s51
      %p55 = scmp.eq.s32.totalorder %s15, 0
      %p56 = por %p54, %p55
      %p57 = scmp.ne.s32.totalorder %s49, %s51
      %p58 = scmp.eq.s32.totalorder %s20, 1
      %p59 = por %p57, %p58
      %p60 = scmp.ne.s32.totalorder %s51, %s52
      %p61 = scmp.eq.s32.totalorder %s20, 0
      %p62 = por %p60, %p61
      %p63 = scmp.ne.s32.totalorder %s51, %s52
      %p64 = scmp.eq.s32.totalorder %s21, 1
      %p65 = por %p63, %p64
      %p67 = scmp.ne.s32.totalorder %s52, %s66
      %p68 = scmp.eq.s32.totalorder %s21, 0
      %p69 = por %p67, %p68
      %s70 = ssub.s32 %s15, %s22
      %p71 = scmp.eq.s32.totalorder %s70, 0
      %s73 = sadd.s32 %s72, 1
      %s74 = scalar_select %p71, %s72, %s73
      %p77 = pneg %p71
      %p78 = scmp.eq.s32.totalorder %s15, 1
      %p79 = por %p77, %p78
      %p80 = scmp.ne.s32.totalorder %s72, %s75
      %p81 = scmp.eq.s32.totalorder %s15, 0
      %p82 = por %p80, %p81
      %p83 = scmp.ne.s32.totalorder %s72, %s75
      %p84 = scmp.eq.s32.totalorder %s20, 1
      %p85 = por %p83, %p84
      %p86 = scmp.ne.s32.totalorder %s75, %s76
      %p87 = scmp.eq.s32.totalorder %s20, 0
      %p88 = por %p86, %p87
      %p89 = scmp.ne.s32.totalorder %s75, %s76
      %p90 = scmp.eq.s32.totalorder %s21, 1
      %p91 = por %p89, %p90
      %p93 = scmp.ne.s32.totalorder %s76, %s92
      %p94 = scmp.eq.s32.totalorder %s21, 0
      %p95 = por %p93, %p94
      %p96 = scmp.le.s32.totalorder 1, %s15
      %p97 = scmp.lt.s32.totalorder %s15, 3
      %p98 = pnand %p96, %p97
      %p99 = pneg %p98
      // Predicated region
      $region9: #{tpu_custom_call.1} parent=5 // pred_check
        _
      $region10: #{tpu_custom_call.1} parent=5 // pred_check_branch
        %101 = sbr.rel (%p98) target = $region12
      $region11: #{tpu_custom_call.1} parent=5 // pred_region
        %s102 = ssub.s32 %s15, 1
        // Predicated region
        $region13: #{tpu_custom_call.1} parent=11 // pred_check
          %p103 = pneg %p62
        $region14: #{tpu_custom_call.1} parent=11 // pred_check_branch
          %105 = sbr.rel (%p103) target = $region16
        $region15: #{tpu_custom_call.1} parent=11 // pred_region
          %s107 = ssub.s32 32, 32
          %108 = vsyncadd [#allocation6], %s107
          %s110 = sshll.u32 [#allocation5], 4
          %s111 = int_to_ptr.vmem [resolvable:$true] %s110
          %113 = dma.hbm_to_vmem [thread:$0]  %s1, 32, %s111, [#allocation6]
        $region16: #{tpu_custom_call.1} parent=11 // pred_fallthru
          _
      $region12: #{tpu_custom_call.1} parent=5 // pred_fallthru
        _
      %p114 = scmp.lt.s32.totalorder %s15, 2
      // Predicated region
      $region17: #{tpu_custom_call.1} parent=5 // pred_check
        %p115 = pneg %p114
      $region18: #{tpu_custom_call.1} parent=5 // pred_check_branch
        %117 = sbr.rel (%p115) target = $region20
      $region19: #{tpu_custom_call.1} parent=5 // pred_region
        // Predicated region
        $region21: #{tpu_custom_call.1} parent=19 // pred_check
          %p118 = pneg %p35
        $region22: #{tpu_custom_call.1} parent=19 // pred_check_branch
          %120 = sbr.rel (%p118) target = $region24
        $region23: #{tpu_custom_call.1} parent=19 // pred_region
          %s121 = sand.u32 %s25, 1
          %s122 = scalar_lea.sflag [#allocation3], %s121
          %s123 = sand.u32 %s25, 1
          %s124 = smul.addr %s123, 256
          %s125 = scalar_lea.vmem [#allocation2], %s124
          %s126 = smul.u32 8, %s15
          %s128 = ssub.s32 4096, 4096
          %129 = vsyncadd %s122, %s128
          %s130 = smul.addr %s126, 4
          %s131 = smul.addr %s130, 128
          %s132 = scalar_lea.hbm %s0, %s131
          %s133 = sshll.u32 %s125, 4
          %s134 = int_to_ptr.vmem [resolvable:$true] %s133
          %139 = dma.hbm_to_vmem [thread:$0]  %s132, 4096, %s134, %s122, 256, 256, 16
        $region24: #{tpu_custom_call.1} parent=19 // pred_fallthru
          _
      $region20: #{tpu_custom_call.1} parent=5 // pred_fallthru
        _
      %p140 = scmp.le.s32.totalorder 1, %s15
      %p141 = scmp.lt.s32.totalorder %s15, 3
      %p142 = pnand %p140, %p141
      %p143 = pneg %p142
      // Predicated region
      $region25: #{tpu_custom_call.1} parent=5 // pred_check
        _
      $region26: #{tpu_custom_call.1} parent=5 // pred_check_branch
        %145 = sbr.rel (%p142) target = $region28
      $region27: #{tpu_custom_call.1} parent=5 // pred_region
        %s146 = ssub.s32 %s15, 1
        %s147 = sand.u32 %s28, 1
        %s148 = scalar_lea.sflag [#allocation3], %s147
        %s149 = sand.u32 %s28, 1
        %s150 = smul.addr %s149, 256
        %s151 = scalar_lea.vmem [#allocation2], %s150
        // Predicated region
        $region29: #{tpu_custom_call.1} parent=27 // pred_check
          %p152 = pneg %p41
        $region30: #{tpu_custom_call.1} parent=27 // pred_check_branch
          %154 = sbr.rel (%p152) target = $region32
        $region31: #{tpu_custom_call.1} parent=27 // pred_region
          %155 = dma.done %s148, 4096
        $region32: #{tpu_custom_call.1} parent=27 // pred_fallthru
          _
        // Predicated region
        $region33: #{tpu_custom_call.1} parent=27 // pred_check
          %p156 = pneg %p62
        $region34: #{tpu_custom_call.1} parent=27 // pred_check_branch
          %158 = sbr.rel (%p156) target = $region36
        $region35: #{tpu_custom_call.1} parent=27 // pred_region
          %159 = dma.done [#allocation6], 32
        $region36: #{tpu_custom_call.1} parent=27 // pred_fallthru
          _
        %s160 = sand.u32 %s28, 1
        %s161 = scalar_lea.sflag [#allocation3], %s160
        %s162 = sand.u32 %s28, 1
        %s163 = smul.addr %s162, 256
        %s164 = scalar_lea.vmem [#allocation2], %s163
        %p165 = pneg %p41
        %p166 = pneg %p38
        %p167 = pneg %p62
        %p168 = pneg %p59
        %p169 = pneg %p88
        %p170 = pneg %p85
        %s171 = sand.u32 %s75, 1
        %s172 = scalar_lea.sflag [#allocation4], %s171
        %s173 = sand.u32 %s75, 1
        %s174 = smul.addr %s173, 16
        %s175 = scalar_lea.vmem [#allocation7], %s174
        %s176 = smul.u32 8, %s20
        %v177 = vld [vmem:[%s151] sm:$0xff]
        %v178 = vld [vmem:[%s151 + $0x8] sm:$0xff]
        %v179 = vld [vmem:[%s151 + $0x10] sm:$0xff]
        %v180 = vld [vmem:[%s151 + $0x18] sm:$0xff]
        %v181 = vld [vmem:[%s151 + $0x20] sm:$0xff]
        %v182 = vld [vmem:[%s151 + $0x28] sm:$0xff]
        %v183 = vld [vmem:[%s151 + $0x30] sm:$0xff]
        %v184 = vld [vmem:[%s151 + $0x38] sm:$0xff]
        %v185 = vld [vmem:[%s151 + $0x40] sm:$0xff]
        %v186 = vld [vmem:[%s151 + $0x48] sm:$0xff]
        %v187 = vld [vmem:[%s151 + $0x50] sm:$0xff]
        %v188 = vld [vmem:[%s151 + $0x58] sm:$0xff]
        %v189 = vld [vmem:[%s151 + $0x60] sm:$0xff]
        %v190 = vld [vmem:[%s151 + $0x68] sm:$0xff]
        %v191 = vld [vmem:[%s151 + $0x70] sm:$0xff]
        %v192 = vld [vmem:[%s151 + $0x78] sm:$0xff]
        %v193 = vld [vmem:[%s151 + $0x80] sm:$0xff]
        %v194 = vld [vmem:[%s151 + $0x88] sm:$0xff]
        %v195 = vld [vmem:[%s151 + $0x90] sm:$0xff]
        %v196 = vld [vmem:[%s151 + $0x98] sm:$0xff]
        %v197 = vld [vmem:[%s151 + $0xa0] sm:$0xff]
        %v198 = vld [vmem:[%s151 + $0xa8] sm:$0xff]
        %v199 = vld [vmem:[%s151 + $0xb0] sm:$0xff]
        %v200 = vld [vmem:[%s151 + $0xb8] sm:$0xff]
        %v201 = vld [vmem:[%s151 + $0xc0] sm:$0xff]
        %v202 = vld [vmem:[%s151 + $0xc8] sm:$0xff]
        %v203 = vld [vmem:[%s151 + $0xd0] sm:$0xff]
        %v204 = vld [vmem:[%s151 + $0xd8] sm:$0xff]
        %v205 = vld [vmem:[%s151 + $0xe0] sm:$0xff]
        %v206 = vld [vmem:[%s151 + $0xe8] sm:$0xff]
        %v207 = vld [vmem:[%s151 + $0xf0] sm:$0xff]
        %v208 = vld [vmem:[%s151 + $0xf8] sm:$0xff]
        %v209 = vld [vmem:[#allocation5] sm:$0x3]
        %v211 = vlaneseq
        %v212 = vshrl.u32 %v211, 7
        %v213 = vsub.s32 0, %v212
        %v214 = vrot.slane %v209, %v213
        %v215 = vlaneseq
        %v216 = vshrl.u32 %v215, 7
        %v217 = vsub.s32 1, %v216
        %v218 = vrot.slane %v209, %v217
        %v221 = vmul.f32 %v177, %v214
        %v222 = vmul.f32 %v178, %v218
        %v223 = vmul.f32 %v179, %v214
        %v224 = vmul.f32 %v180, %v218
        %v225 = vmul.f32 %v181, %v214
        %v226 = vmul.f32 %v182, %v218
        %v227 = vmul.f32 %v183, %v214
        %v228 = vmul.f32 %v184, %v218
        %v229 = vmul.f32 %v185, %v214
        %v230 = vmul.f32 %v186, %v218
        %v231 = vmul.f32 %v187, %v214
        %v232 = vmul.f32 %v188, %v218
        %v233 = vmul.f32 %v189, %v214
        %v234 = vmul.f32 %v190, %v218
        %v235 = vmul.f32 %v191, %v214
        %v236 = vmul.f32 %v192, %v218
        %v237 = vmul.f32 %v193, %v214
        %v238 = vmul.f32 %v194, %v218
        %v239 = vmul.f32 %v195, %v214
        %v240 = vmul.f32 %v196, %v218
        %v241 = vmul.f32 %v197, %v214
        %v242 = vmul.f32 %v198, %v218
        %v243 = vmul.f32 %v199, %v214
        %v244 = vmul.f32 %v200, %v218
        %v245 = vmul.f32 %v201, %v214
        %v246 = vmul.f32 %v202, %v218
        %v247 = vmul.f32 %v203, %v214
        %v248 = vmul.f32 %v204, %v218
        %v249 = vmul.f32 %v205, %v214
        %v250 = vmul.f32 %v206, %v218
        %v251 = vmul.f32 %v207, %v214
        %v252 = vmul.f32 %v208, %v218
        %v253 = vadd.f32 %v221, %v222
        %254 = vadd.xlane.f32.xlu0 %v253
        %v255 = vpop.xlane.xlu0 %254
        %v256 = vadd.f32 %v223, %v224
        %257 = vadd.xlane.f32.xlu0 %v256
        %v258 = vpop.xlane.xlu0 %257
        %v259 = vadd.f32 %v225, %v226
        %260 = vadd.xlane.f32.xlu0 %v259
        %v261 = vpop.xlane.xlu0 %260
        %v262 = vadd.f32 %v227, %v228
        %263 = vadd.xlane.f32.xlu0 %v262
        %v264 = vpop.xlane.xlu0 %263
        %v265 = vadd.f32 %v229, %v230
        %266 = vadd.xlane.f32.xlu0 %v265
        %v267 = vpop.xlane.xlu0 %266
        %v268 = vadd.f32 %v231, %v232
        %269 = vadd.xlane.f32.xlu0 %v268
        %v270 = vpop.xlane.xlu0 %269
        %v271 = vadd.f32 %v233, %v234
        %272 = vadd.xlane.f32.xlu0 %v271
        %v273 = vpop.xlane.xlu0 %272
        %v274 = vadd.f32 %v235, %v236
        %275 = vadd.xlane.f32.xlu0 %v274
        %v276 = vpop.xlane.xlu0 %275
        %v277 = vadd.f32 %v237, %v238
        %278 = vadd.xlane.f32.xlu0 %v277
        %v279 = vpop.xlane.xlu0 %278
        %v280 = vadd.f32 %v239, %v240
        %281 = vadd.xlane.f32.xlu0 %v280
        %v282 = vpop.xlane.xlu0 %281
        %v283 = vadd.f32 %v241, %v242
        %284 = vadd.xlane.f32.xlu0 %v283
        %v285 = vpop.xlane.xlu0 %284
        %v286 = vadd.f32 %v243, %v244
        %287 = vadd.xlane.f32.xlu0 %v286
        %v288 = vpop.xlane.xlu0 %287
        %v289 = vadd.f32 %v245, %v246
        %290 = vadd.xlane.f32.xlu0 %v289
        %v291 = vpop.xlane.xlu0 %290
        %v292 = vadd.f32 %v247, %v248
        %293 = vadd.xlane.f32.xlu0 %v292
        %v294 = vpop.xlane.xlu0 %293
        %v295 = vadd.f32 %v249, %v250
        %296 = vadd.xlane.f32.xlu0 %v295
        %v297 = vpop.xlane.xlu0 %296
        %v298 = vadd.f32 %v251, %v252
        %299 = vadd.xlane.f32.xlu0 %v298
        %v300 = vpop.xlane.xlu0 %299
        %v301 = vtanh.pop %v255
        %v302 = vtanh.pop %v258
        %v303 = vtanh.pop %v261
        %v304 = vtanh.pop %v264
        %v305 = vtanh.pop %v267
        %v306 = vtanh.pop %v270
        %v307 = vtanh.pop %v273
        %v308 = vtanh.pop %v276
        %v309 = vtanh.pop %v279
        %v310 = vtanh.pop %v282
        %v311 = vtanh.pop %v285
        %v312 = vtanh.pop %v288
        %v313 = vtanh.pop %v291
        %v314 = vtanh.pop %v294
        %v315 = vtanh.pop %v297
        %v316 = vtanh.pop %v300
        %v317 = vmul.f32 %v301, 1.442695
        %v318 = vpow.pop %v317
        %v319 = vmul.f32 %v302, 1.442695
        %v320 = vpow.pop %v319
        %v321 = vmul.f32 %v303, 1.442695
        %v322 = vpow.pop %v321
        %v323 = vmul.f32 %v304, 1.442695
        %v324 = vpow.pop %v323
        %v325 = vmul.f32 %v305, 1.442695
        %v326 = vpow.pop %v325
        %v327 = vmul.f32 %v306, 1.442695
        %v328 = vpow.pop %v327
        %v329 = vmul.f32 %v307, 1.442695
        %v330 = vpow.pop %v329
        %v331 = vmul.f32 %v308, 1.442695
        %v332 = vpow.pop %v331
        %v333 = vmul.f32 %v309, 1.442695
        %v334 = vpow.pop %v333
        %v335 = vmul.f32 %v310, 1.442695
        %v336 = vpow.pop %v335
        %v337 = vmul.f32 %v311, 1.442695
        %v338 = vpow.pop %v337
        %v339 = vmul.f32 %v312, 1.442695
        %v340 = vpow.pop %v339
        %v341 = vmul.f32 %v313, 1.442695
        %v342 = vpow.pop %v341
        %v343 = vmul.f32 %v314, 1.442695
        %v344 = vpow.pop %v343
        %v345 = vmul.f32 %v315, 1.442695
        %v346 = vpow.pop %v345
        %v347 = vmul.f32 %v316, 1.442695
        %v348 = vpow.pop %v347
        %v349 = vadd.f32 %v318, %v320
        %v350 = vrot.slane %v349, 4
        %v351 = vadd.f32 %v349, %v350
        %v352 = vrot.slane %v351, 2
        %v353 = vadd.f32 %v351, %v352
        %v354 = vrot.slane %v353, 1
        %v355 = vadd.f32 %v353, %v354
        %v356 = vadd.f32 %v322, %v324
        %v357 = vrot.slane %v356, 4
        %v358 = vadd.f32 %v356, %v357
        %v359 = vrot.slane %v358, 2
        %v360 = vadd.f32 %v358, %v359
        %v361 = vrot.slane %v360, 1
        %v362 = vadd.f32 %v360, %v361
        %v363 = vadd.f32 %v326, %v328
        %v364 = vrot.slane %v363, 4
        %v365 = vadd.f32 %v363, %v364
        %v366 = vrot.slane %v365, 2
        %v367 = vadd.f32 %v365, %v366
        %v368 = vrot.slane %v367, 1
        %v369 = vadd.f32 %v367, %v368
        %v370 = vadd.f32 %v330, %v332
        %v371 = vrot.slane %v370, 4
        %v372 = vadd.f32 %v370, %v371
        %v373 = vrot.slane %v372, 2
        %v374 = vadd.f32 %v372, %v373
        %v375 = vrot.slane %v374, 1
        %v376 = vadd.f32 %v374, %v375
        %v377 = vadd.f32 %v334, %v336
        %v378 = vrot.slane %v377, 4
        %v379 = vadd.f32 %v377, %v378
        %v380 = vrot.slane %v379, 2
        %v381 = vadd.f32 %v379, %v380
        %v382 = vrot.slane %v381, 1
        %v383 = vadd.f32 %v381, %v382
        %v384 = vadd.f32 %v338, %v340
        %v385 = vrot.slane %v384, 4
        %v386 = vadd.f32 %v384, %v385
        %v387 = vrot.slane %v386, 2
        %v388 = vadd.f32 %v386, %v387
        %v389 = vrot.slane %v388, 1
        %v390 = vadd.f32 %v388, %v389
        %v391 = vadd.f32 %v342, %v344
        %v392 = vrot.slane %v391, 4
        %v393 = vadd.f32 %v391, %v392
        %v394 = vrot.slane %v393, 2
        %v395 = vadd.f32 %v393, %v394
        %v396 = vrot.slane %v395, 1
        %v397 = vadd.f32 %v395, %v396
        %v398 = vadd.f32 %v346, %v348
        %v399 = vrot.slane %v398, 4
        %v400 = vadd.f32 %v398, %v399
        %v401 = vrot.slane %v400, 2
        %v402 = vadd.f32 %v400, %v401
        %v403 = vrot.slane %v402, 1
        %v404 = vadd.f32 %v402, %v403
        %v405 = vadd.f32 %v355, 1e-10
        %v406 = vadd.f32 %v362, 1e-10
        %v407 = vadd.f32 %v369, 1e-10
        %v408 = vadd.f32 %v376, 1e-10
        %v409 = vadd.f32 %v383, 1e-10
        %v410 = vadd.f32 %v390, 1e-10
        %v411 = vadd.f32 %v397, 1e-10
        %v412 = vadd.f32 %v404, 1e-10
        %v413 = vmul.f32 %v177, %v318
        %v414 = vmul.f32 %v178, %v318
        %v415 = vmul.f32 %v179, %v320
        %v416 = vmul.f32 %v180, %v320
        %v417 = vmul.f32 %v181, %v322
        %v418 = vmul.f32 %v182, %v322
        %v419 = vmul.f32 %v183, %v324
        %v420 = vmul.f32 %v184, %v324
        %v421 = vmul.f32 %v185, %v326
        %v422 = vmul.f32 %v186, %v326
        %v423 = vmul.f32 %v187, %v328
        %v424 = vmul.f32 %v188, %v328
        %v425 = vmul.f32 %v189, %v330
        %v426 = vmul.f32 %v190, %v330
        %v427 = vmul.f32 %v191, %v332
        %v428 = vmul.f32 %v192, %v332
        %v429 = vmul.f32 %v193, %v334
        %v430 = vmul.f32 %v194, %v334
        %v431 = vmul.f32 %v195, %v336
        %v432 = vmul.f32 %v196, %v336
        %v433 = vmul.f32 %v197, %v338
        %v434 = vmul.f32 %v198, %v338
        %v435 = vmul.f32 %v199, %v340
        %v436 = vmul.f32 %v200, %v340
        %v437 = vmul.f32 %v201, %v342
        %v438 = vmul.f32 %v202, %v342
        %v439 = vmul.f32 %v203, %v344
        %v440 = vmul.f32 %v204, %v344
        %v441 = vmul.f32 %v205, %v346
        %v442 = vmul.f32 %v206, %v346
        %v443 = vmul.f32 %v207, %v348
        %v444 = vmul.f32 %v208, %v348
        %v445 = vadd.f32 %v413, %v415
        %v446 = vrot.slane %v445, 4
        %v447 = vadd.f32 %v445, %v446
        %v448 = vrot.slane %v447, 2
        %v449 = vadd.f32 %v447, %v448
        %v450 = vrot.slane %v449, 1
        %v451 = vadd.f32 %v449, %v450
        %v452 = vadd.f32 %v414, %v416
        %v453 = vrot.slane %v452, 4
        %v454 = vadd.f32 %v452, %v453
        %v455 = vrot.slane %v454, 2
        %v456 = vadd.f32 %v454, %v455
        %v457 = vrot.slane %v456, 1
        %v458 = vadd.f32 %v456, %v457
        %v459 = vadd.f32 %v417, %v419
        %v460 = vrot.slane %v459, 4
        %v461 = vadd.f32 %v459, %v460
        %v462 = vrot.slane %v461, 2
        %v463 = vadd.f32 %v461, %v462
        %v464 = vrot.slane %v463, 1
        %v465 = vadd.f32 %v463, %v464
        %v466 = vadd.f32 %v418, %v420
        %v467 = vrot.slane %v466, 4
        %v468 = vadd.f32 %v466, %v467
        %v469 = vrot.slane %v468, 2
        %v470 = vadd.f32 %v468, %v469
        %v471 = vrot.slane %v470, 1
        %v472 = vadd.f32 %v470, %v471
        %v473 = vadd.f32 %v421, %v423
        %v474 = vrot.slane %v473, 4
        %v475 = vadd.f32 %v473, %v474
        %v476 = vrot.slane %v475, 2
        %v477 = vadd.f32 %v475, %v476
        %v478 = vrot.slane %v477, 1
        %v479 = vadd.f32 %v477, %v478
        %v480 = vadd.f32 %v422, %v424
        %v481 = vrot.slane %v480, 4
        %v482 = vadd.f32 %v480, %v481
        %v483 = vrot.slane %v482, 2
        %v484 = vadd.f32 %v482, %v483
        %v485 = vrot.slane %v484, 1
        %v486 = vadd.f32 %v484, %v485
        %v487 = vadd.f32 %v425, %v427
        %v488 = vrot.slane %v487, 4
        %v489 = vadd.f32 %v487, %v488
        %v490 = vrot.slane %v489, 2
        %v491 = vadd.f32 %v489, %v490
        %v492 = vrot.slane %v491, 1
        %v493 = vadd.f32 %v491, %v492
        %v494 = vadd.f32 %v426, %v428
        %v495 = vrot.slane %v494, 4
        %v496 = vadd.f32 %v494, %v495
        %v497 = vrot.slane %v496, 2
        %v498 = vadd.f32 %v496, %v497
        %v499 = vrot.slane %v498, 1
        %v500 = vadd.f32 %v498, %v499
        %v501 = vadd.f32 %v429, %v431
        %v502 = vrot.slane %v501, 4
        %v503 = vadd.f32 %v501, %v502
        %v504 = vrot.slane %v503, 2
        %v505 = vadd.f32 %v503, %v504
        %v506 = vrot.slane %v505, 1
        %v507 = vadd.f32 %v505, %v506
        %v508 = vadd.f32 %v430, %v432
        %v509 = vrot.slane %v508, 4
        %v510 = vadd.f32 %v508, %v509
        %v511 = vrot.slane %v510, 2
        %v512 = vadd.f32 %v510, %v511
        %v513 = vrot.slane %v512, 1
        %v514 = vadd.f32 %v512, %v513
        %v515 = vadd.f32 %v433, %v435
        %v516 = vrot.slane %v515, 4
        %v517 = vadd.f32 %v515, %v516
        %v518 = vrot.slane %v517, 2
        %v519 = vadd.f32 %v517, %v518
        %v520 = vrot.slane %v519, 1
        %v521 = vadd.f32 %v519, %v520
        %v522 = vadd.f32 %v434, %v436
        %v523 = vrot.slane %v522, 4
        %v524 = vadd.f32 %v522, %v523
        %v525 = vrot.slane %v524, 2
        %v526 = vadd.f32 %v524, %v525
        %v527 = vrot.slane %v526, 1
        %v528 = vadd.f32 %v526, %v527
        %v529 = vadd.f32 %v437, %v439
        %v530 = vrot.slane %v529, 4
        %v531 = vadd.f32 %v529, %v530
        %v532 = vrot.slane %v531, 2
        %v533 = vadd.f32 %v531, %v532
        %v534 = vrot.slane %v533, 1
        %v535 = vadd.f32 %v533, %v534
        %v536 = vadd.f32 %v438, %v440
        %v537 = vrot.slane %v536, 4
        %v538 = vadd.f32 %v536, %v537
        %v539 = vrot.slane %v538, 2
        %v540 = vadd.f32 %v538, %v539
        %v541 = vrot.slane %v540, 1
        %v542 = vadd.f32 %v540, %v541
        %v543 = vadd.f32 %v441, %v443
        %v544 = vrot.slane %v543, 4
        %v545 = vadd.f32 %v543, %v544
        %v546 = vrot.slane %v545, 2
        %v547 = vadd.f32 %v545, %v546
        %v548 = vrot.slane %v547, 1
        %v549 = vadd.f32 %v547, %v548
        %v550 = vadd.f32 %v442, %v444
        %v551 = vrot.slane %v550, 4
        %v552 = vadd.f32 %v550, %v551
        %v553 = vrot.slane %v552, 2
        %v554 = vadd.f32 %v552, %v553
        %v555 = vrot.slane %v554, 1
        %v556 = vadd.f32 %v554, %v555
        %v557 = vrcp.pop %v405
        %v558 = vrcp.pop %v406
        %v559 = vrcp.pop %v407
        %v560 = vrcp.pop %v408
        %v561 = vrcp.pop %v409
        %v562 = vrcp.pop %v410
        %v563 = vrcp.pop %v411
        %v564 = vrcp.pop %v412
        %v565 = vmul.f32 %v451, %v557
        %v566 = vmul.f32 %v458, %v557
        %v567 = vmul.f32 %v465, %v558
        %v568 = vmul.f32 %v472, %v558
        %v569 = vmul.f32 %v479, %v559
        %v570 = vmul.f32 %v486, %v559
        %v571 = vmul.f32 %v493, %v560
        %v572 = vmul.f32 %v500, %v560
        %v573 = vmul.f32 %v507, %v561
        %v574 = vmul.f32 %v514, %v561
        %v575 = vmul.f32 %v521, %v562
        %v576 = vmul.f32 %v528, %v562
        %v577 = vmul.f32 %v535, %v563
        %v578 = vmul.f32 %v542, %v563
        %v579 = vmul.f32 %v549, %v564
        %v580 = vmul.f32 %v556, %v564
        %vm597 = vcmask 1041409
        %v598 = vsel %vm597, %v567, %v565
        %vm599 = vcmask 1042434
        %v600 = vsel %vm599, %v569, %v598
        %vm601 = vcmask 1043459
        %v602 = vsel %vm601, %v571, %v600
        %vm603 = vcmask 1044484
        %v604 = vsel %vm603, %v573, %v602
        %vm605 = vcmask 1045509
        %v606 = vsel %vm605, %v575, %v604
        %vm607 = vcmask 1046534
        %v608 = vsel %vm607, %v577, %v606
        %vm609 = vcmask 1047559
        %v610 = vsel %vm609, %v579, %v608
        %v611 = vsel %vm597, %v568, %v566
        %v612 = vsel %vm599, %v570, %v611
        %v613 = vsel %vm601, %v572, %v612
        %v614 = vsel %vm603, %v574, %v613
        %v615 = vsel %vm605, %v576, %v614
        %v616 = vsel %vm607, %v578, %v615
        %v617 = vsel %vm609, %v580, %v616
        %620 = vst [vmem:[%s175] sm:$0xff] %v610
        %621 = vst [vmem:[%s175 + $0x8] sm:$0xff] %v617
        %s622 = sand.u32 %s75, 1
        %s623 = scalar_lea.sflag [#allocation4], %s622
        %s624 = sand.u32 %s75, 1
        %s625 = smul.addr %s624, 16
        %s626 = scalar_lea.vmem [#allocation7], %s625
        // Predicated region
        $region37: #{tpu_custom_call.1} parent=27 // pred_check
          %p627 = pneg %p85
        $region38: #{tpu_custom_call.1} parent=27 // pred_check_branch
          %629 = sbr.rel (%p627) target = $region40
        $region39: #{tpu_custom_call.1} parent=27 // pred_region
          %s631 = ssub.s32 256, 256
          %632 = vsyncadd %s623, %s631
          %s633 = smul.addr %s20, 2
          %s634 = smul.addr %s633, 128
          %s635 = scalar_lea.hbm %s2, %s634
          %s637 = sshll.u32 %s626, 4
          %s638 = int_to_ptr.vmem [resolvable:$true] %s637
          %640 = dma.vmem_to_hbm [thread:$0]  %s638, 256, %s635, %s623
        $region40: #{tpu_custom_call.1} parent=27 // pred_fallthru
          _
      $region28: #{tpu_custom_call.1} parent=5 // pred_fallthru
        _
      %p641 = scmp.le.s32.totalorder 2, %s15
      // Predicated region
      $region41: #{tpu_custom_call.1} parent=5 // pred_check
        %p642 = pneg %p641
      $region42: #{tpu_custom_call.1} parent=5 // pred_check_branch
        %644 = sbr.rel (%p642) target = $region44
      $region43: #{tpu_custom_call.1} parent=5 // pred_region
        %s645 = ssub.s32 %s15, 2
        // Predicated region
        $region45: #{tpu_custom_call.1} parent=43 // pred_check
          %p646 = pneg %p91
        $region46: #{tpu_custom_call.1} parent=43 // pred_check_branch
          %648 = sbr.rel (%p646) target = $region48
        $region47: #{tpu_custom_call.1} parent=43 // pred_region
          %s649 = sand.u32 %s76, 1
          %s650 = scalar_lea.sflag [#allocation4], %s649
          %s651 = sand.u32 %s76, 1
          %s652 = smul.addr %s651, 16
          %s653 = scalar_lea.vmem [#allocation7], %s652
          %654 = dma.done %s650, 256
        $region48: #{tpu_custom_call.1} parent=43 // pred_fallthru
          _
      $region44: #{tpu_custom_call.1} parent=5 // pred_fallthru
        _
    $region6: #{tpu_custom_call.1} parent=1 // loop_footer
      %s19 = sadd.s32 1, %s15
    $region7: #{tpu_custom_call.1} parent=1 // loop_footer_branch
      %14 = sbr.rel target = $region3
    $region8: #{tpu_custom_call.1} parent=1 // loop_exit
      _
    %655 = vsyncpa [#allocation3], 1
    %s656 = scalar_lea.sflag [#allocation3], 1
    %657 = vsyncpa %s656, 1
    %658 = vsyncpa [#allocation6], 1
    %659 = vsyncpa [#allocation4], 1
    %s660 = scalar_lea.sflag [#allocation4], 1
    %661 = vsyncpa %s660, 1

</llo_original>
